<compile_context>
chip_gen: v7x
topology: tpu7x:2x2x1
jax: 0.10.0
libtpu: 0.0.40
codegen_flags: <defaults>
</compile_context>

<pallas_src>
import jax
import jax.numpy as jnp
import numpy as np
from jax.experimental import pallas as pl
from jax.experimental.pallas import tpu as pltpu


def _mlp_kernel(x_ref, w1_ref, b1_ref, w2_ref, b2_ref, w3_ref, b3_ref, o_ref):
    # linear_1 + ReLU  (dropout p=0.0 -> identity, elided)
    h = jnp.dot(x_ref[...], w1_ref[...], preferred_element_type=jnp.float32)
    h = jnp.maximum(h + b1_ref[...], 0.0)
    # linear_2 + ReLU
    h = jnp.dot(h.astype(w2_ref.dtype), w2_ref[...], preferred_element_type=jnp.float32)
    h = jnp.maximum(h + b2_ref[...], 0.0)
    # linear_3: per-row dot against a (1, h2) weight row -> VPU mul + XLU lane reduce,
    # instead of a K=32 / 1-output-column MXU matmul. b3 is a scalar read from SMEM.
    z = jnp.sum(h * w3_ref[...], axis=-1, keepdims=True) + b3_ref[0, 0]
    # sigmoid: exp on EUP; reciprocal via pl.reciprocal (approx=True available if a
    # looser output tolerance is acceptable).
    o_ref[...] = pl.reciprocal(1.0 + jnp.exp(-z), approx=False)


def _pick_tile_m(n):
    # Large tiles amortize the ~0.35us/grid-step overhead; keep >=2 parallel steps so
    # v7x's two TensorCores both get work.
    for cand in (2048, 1024, 512, 256, 128, 64, 32, 16, 8):
        if cand <= n // 2 and n % cand == 0:
            return cand
    return n  # tiny batch: single step


def lr_classification_forward(x, params, *, tile_m=None, compute_dtype=jnp.bfloat16):
    """Pallas forward of LR_Classification. x: (N, in_feats) -> (N, 1) f32."""
    w1, b1, w2, b2, w3, b3 = params
    N, in_feats = x.shape
    h1 = w1.shape[1]
    h2 = w2.shape[1]
    if tile_m is None:
        tile_m = _pick_tile_m(N)
    assert N % tile_m == 0, "batch must be divisible by tile_m"

    # MXU operands in bf16 (native datapath; halves streamed-X HBM bytes when X is
    # already stored in bf16 upstream). Epilogue math stays f32.
    x_c = x.astype(compute_dtype)
    w1_c = w1.astype(compute_dtype)
    w2_c = w2.astype(compute_dtype)
    b1_r = b1.reshape(1, h1).astype(jnp.float32)
    b2_r = b2.reshape(1, h2).astype(jnp.float32)
    # Final layer runs on the VPU in f32; expose its weight as a (1, h2) row.
    w3_row = w3.reshape(1, h2).astype(jnp.float32)
    b3_s = b3.reshape(1, 1).astype(jnp.float32)

    grid = (N // tile_m,)
    invariant = lambda i: (0, 0)  # weights/biases: same (whole) block every step

    return pl.pallas_call(
        _mlp_kernel,
        out_shape=jax.ShapeDtypeStruct((N, 1), jnp.float32),
        grid=grid,
        in_specs=[
            pl.BlockSpec((tile_m, in_feats), lambda i: (i, 0)),   # X tile (bf16, streamed)
            pl.BlockSpec((in_feats, h1), invariant),              # W1 (bf16)
            pl.BlockSpec((1, h1), invariant),                     # b1 (f32)
            pl.BlockSpec((h1, h2), invariant),                    # W2 (bf16)
            pl.BlockSpec((1, h2), invariant),                     # b2 (f32)
            pl.BlockSpec((1, h2), invariant),                     # w3 row (f32)
            pl.BlockSpec(memory_space=pltpu.MemorySpace.SMEM),    # b3 scalar (f32, SMEM)
        ],
        out_specs=pl.BlockSpec((tile_m, 1), lambda i: (i, 0)),
        compiler_params=pltpu.CompilerParams(
            dimension_semantics=("parallel",),
        ),
    )(x_c, w1_c, b1_r, w2_c, b2_r, w3_row, b3_s)


def init_params(key, in_feats, hid1, hid2):
    """Deterministic synthetic init matching nn.Linear shapes (stored transposed)."""
    ks = jax.random.split(key, 6)

    def lin(kw, kb, fan_in, fan_out):
        bound = 1.0 / np.sqrt(fan_in)
        w = jax.random.uniform(kw, (fan_in, fan_out), jnp.float32, -bound, bound)
        b = jax.random.uniform(kb, (1, fan_out), jnp.float32, -bound, bound)
        return w, b

    w1, b1 = lin(ks[0], ks[1], in_feats, hid1)
    w2, b2 = lin(ks[2], ks[3], hid1, hid2)
    w3, b3 = lin(ks[4], ks[5], hid2, 1)
    return (w1, b1, w2, b2, w3, b3)


def _reference_f32(x, params):
    # Exact module semantics (pure f32). TODO(synk): dropout p>0 (training mode) not implemented.
    w1, b1, w2, b2, w3, b3 = params
    h = jnp.maximum(x @ w1 + b1, 0.0)
    h = jnp.maximum(h @ w2 + b2, 0.0)
    return jax.nn.sigmoid(h @ w3 + b3)


def _reference_bf16(x, params, compute_dtype=jnp.bfloat16):
    # Same operand-precision choices as the kernel (bf16 matmul inputs, f32 accumulation).
    w1, b1, w2, b2, w3, b3 = params
    h = jnp.dot(x.astype(compute_dtype), w1.astype(compute_dtype),
                preferred_element_type=jnp.float32) + b1
    h = jnp.maximum(h, 0.0)
    h = jnp.dot(h.astype(compute_dtype), w2.astype(compute_dtype),
                preferred_element_type=jnp.float32) + b2
    h = jnp.maximum(h, 0.0)
    return jax.nn.sigmoid(h @ w3 + b3)


if __name__ == "__main__":
    key = jax.random.PRNGKey(0)
    kx, kp = jax.random.split(key)

    N, in_feats, hid1, hid2 = 256, 32, 64, 32
    x = jax.random.normal(kx, (N, in_feats), jnp.float32)
    params = init_params(kp, in_feats, hid1, hid2)

    fwd = jax.jit(lr_classification_forward)   # tile_m auto -> 128: 2 parallel steps
    y = jax.block_until_ready(fwd(x, params))
    assert y.shape == (N, 1)

    # Tight check vs a JAX reference using the same bf16-operand / f32-accum math.
    np.testing.assert_allclose(np.asarray(y), np.asarray(_reference_bf16(x, params)),
                               rtol=1e-5, atol=1e-5)
    # Loose check vs the exact f32 module semantics (difference = bf16 operand rounding only).
    np.testing.assert_allclose(np.asarray(y), np.asarray(_reference_f32(x, params)),
                               rtol=0, atol=3e-2)

    print("KERNEL_OK")
</pallas_src>

<mosaic_0001>
module attributes {stable_mosaic.version = 11 : i64} {
  func.func @_mlp_kernel(%arg0: i32, %arg1: memref<128x32xbf16, #tpu.memory_space<vmem>>, %arg2: memref<32x64xbf16, #tpu.memory_space<vmem>>, %arg3: memref<1x64xf32, #tpu.memory_space<vmem>>, %arg4: memref<64x32xbf16, #tpu.memory_space<vmem>>, %arg5: memref<1x32xf32, #tpu.memory_space<vmem>>, %arg6: memref<1x32xf32, #tpu.memory_space<vmem>>, %arg7: memref<1x1xf32, #tpu.memory_space<smem>>, %arg8: memref<128x1xf32, #tpu.memory_space<vmem>>) attributes {dimension_semantics = [#tpu.dimension_semantics<parallel>], iteration_bounds = array<i64: 2>, scalar_prefetch = 0 : i64, scratch_operands = 0 : i64, tpu.core_type = #tpu.core_type<tc>, window_params = [{transform_indices = @transform_0, window_bounds = array<i64: 128, 32>}, {pipeline_mode = #tpu.pipeline_mode<synchronous>, transform_indices = @transform_1, window_bounds = array<i64: 32, 64>}, {pipeline_mode = #tpu.pipeline_mode<synchronous>, transform_indices = @transform_2, window_bounds = array<i64: 1, 64>}, {pipeline_mode = #tpu.pipeline_mode<synchronous>, transform_indices = @transform_3, window_bounds = array<i64: 64, 32>}, {pipeline_mode = #tpu.pipeline_mode<synchronous>, transform_indices = @transform_4, window_bounds = array<i64: 1, 32>}, {pipeline_mode = #tpu.pipeline_mode<synchronous>, transform_indices = @transform_5, window_bounds = array<i64: 1, 32>}, {transform_indices = @transform_6, window_bounds = array<i64: 1, 1>}, {transform_indices = @transform_7, window_bounds = array<i64: 128, 1>}]} {
    %c0 = arith.constant 0 : index
    %c0_0 = arith.constant 0 : index
    %0 = vector.load %arg1[%c0, %c0_0] : memref<128x32xbf16, #tpu.memory_space<vmem>>, vector<128x32xbf16>
    %c0_1 = arith.constant 0 : index
    %c0_2 = arith.constant 0 : index
    %1 = vector.load %arg2[%c0_1, %c0_2] : memref<32x64xbf16, #tpu.memory_space<vmem>>, vector<32x64xbf16>
    %cst = arith.constant dense<0.000000e+00> : vector<128x64xf32>
    %2 = tpu.matmul %0, %1, %cst {dimension_numbers = #tpu.dot_dimension_numbers<[1], [0], [0], [1], [0, 0, 1, 1], [], []>} : vector<128x32xbf16>, vector<32x64xbf16>, vector<128x64xf32> -> vector<128x64xf32>
    %c0_3 = arith.constant 0 : index
    %c0_4 = arith.constant 0 : index
    %3 = vector.load %arg3[%c0_3, %c0_4] : memref<1x64xf32, #tpu.memory_space<vmem>>, vector<1x64xf32>
    %4 = vector.broadcast %3 : vector<1x64xf32> to vector<128x64xf32>
    %5 = arith.addf %2, %4 : vector<128x64xf32>
    %cst_5 = arith.constant 0.000000e+00 : f32
    %6 = vector.broadcast %cst_5 : f32 to vector<128x64xf32>
    %7 = arith.maximumf %5, %6 : vector<128x64xf32>
    %8 = arith.truncf %7 : vector<128x64xf32> to vector<128x64xbf16>
    %c0_6 = arith.constant 0 : index
    %c0_7 = arith.constant 0 : index
    %9 = vector.load %arg4[%c0_6, %c0_7] : memref<64x32xbf16, #tpu.memory_space<vmem>>, vector<64x32xbf16>
    %cst_8 = arith.constant dense<0.000000e+00> : vector<128x32xf32>
    %10 = tpu.matmul %8, %9, %cst_8 {dimension_numbers = #tpu.dot_dimension_numbers<[1], [0], [0], [1], [0, 0, 1, 1], [], []>} : vector<128x64xbf16>, vector<64x32xbf16>, vector<128x32xf32> -> vector<128x32xf32>
    %c0_9 = arith.constant 0 : index
    %c0_10 = arith.constant 0 : index
    %11 = vector.load %arg5[%c0_9, %c0_10] : memref<1x32xf32, #tpu.memory_space<vmem>>, vector<1x32xf32>
    %12 = vector.broadcast %11 : vector<1x32xf32> to vector<128x32xf32>
    %13 = arith.addf %10, %12 : vector<128x32xf32>
    %cst_11 = arith.constant 0.000000e+00 : f32
    %14 = vector.broadcast %cst_11 : f32 to vector<128x32xf32>
    %15 = arith.maximumf %13, %14 : vector<128x32xf32>
    %c0_12 = arith.constant 0 : index
    %c0_13 = arith.constant 0 : index
    %16 = vector.load %arg6[%c0_12, %c0_13] : memref<1x32xf32, #tpu.memory_space<vmem>>, vector<1x32xf32>
    %17 = vector.broadcast %16 : vector<1x32xf32> to vector<128x32xf32>
    %18 = arith.mulf %15, %17 : vector<128x32xf32>
    %cst_14 = arith.constant dense<0.000000e+00> : vector<128xf32>
    %19 = vector.multi_reduction <add>, %18, %cst_14 [1] : vector<128x32xf32> to vector<128xf32>
    %20 = vector.shape_cast %19 : vector<128xf32> to vector<128x1xf32>
    %c0_15 = arith.constant 0 : index
    %c0_16 = arith.constant 0 : index
    %21 = memref.load %arg7[%c0_15, %c0_16] : memref<1x1xf32, #tpu.memory_space<smem>>
    %22 = vector.broadcast %21 : f32 to vector<128x1xf32>
    %23 = arith.addf %20, %22 : vector<128x1xf32>
    %cst_17 = arith.constant 0.000000e+00 : f32
    %24 = vector.broadcast %cst_17 : f32 to vector<128x1xf32>
    %25 = arith.subf %24, %23 : vector<128x1xf32>
    %26 = math.exp %25 : vector<128x1xf32>
    %cst_18 = arith.constant 1.000000e+00 : f32
    %27 = vector.broadcast %cst_18 : f32 to vector<128x1xf32>
    %28 = arith.addf %27, %26 : vector<128x1xf32>
    %29 = tpu.reciprocal %28 : vector<128x1xf32> -> vector<128x1xf32>
    %c0_19 = arith.constant 0 : index
    %c0_20 = arith.constant 0 : index
    %30 = vector.load %arg8[%c0_19, %c0_20] : memref<128x1xf32, #tpu.memory_space<vmem>>, vector<128x1xf32>
    tpu.vector_store %arg8[%c0_19, %c0_20], %29 {strides = array<i32>} : memref<128x1xf32, #tpu.memory_space<vmem>>, vector<128x1xf32>,
    return
  }
  func.func @transform_0(%arg0: i32) -> (i32, i32) {
    %c0_i32 = arith.constant 0 : i32
    %c0_i32_0 = arith.constant 0 : i32
    return %arg0, %c0_i32 : i32, i32
  }
  func.func @transform_1(%arg0: i32) -> (i32, i32) {
    %c0_i32 = arith.constant 0 : i32
    %c0_i32_0 = arith.constant 0 : i32
    %c0_i32_1 = arith.constant 0 : i32
    return %c0_i32, %c0_i32_0 : i32, i32
  }
  func.func @transform_2(%arg0: i32) -> (i32, i32) {
    %c0_i32 = arith.constant 0 : i32
    %c0_i32_0 = arith.constant 0 : i32
    %c0_i32_1 = arith.constant 0 : i32
    return %c0_i32, %c0_i32_0 : i32, i32
  }
  func.func @transform_3(%arg0: i32) -> (i32, i32) {
    %c0_i32 = arith.constant 0 : i32
    %c0_i32_0 = arith.constant 0 : i32
    %c0_i32_1 = arith.constant 0 : i32
    return %c0_i32, %c0_i32_0 : i32, i32
  }
  func.func @transform_4(%arg0: i32) -> (i32, i32) {
    %c0_i32 = arith.constant 0 : i32
    %c0_i32_0 = arith.constant 0 : i32
    %c0_i32_1 = arith.constant 0 : i32
    return %c0_i32, %c0_i32_0 : i32, i32
  }
  func.func @transform_5(%arg0: i32) -> (i32, i32) {
    %c0_i32 = arith.constant 0 : i32
    %c0_i32_0 = arith.constant 0 : i32
    %c0_i32_1 = arith.constant 0 : i32
    return %c0_i32, %c0_i32_0 : i32, i32
  }
  func.func @transform_6(%arg0: i32) -> (i32, i32) {
    %c0_i32 = arith.constant 0 : i32
    %c0_i32_0 = arith.constant 0 : i32
    %c0_i32_1 = arith.constant 0 : i32
    return %c0_i32, %c0_i32_0 : i32, i32
  }
  func.func @transform_7(%arg0: i32) -> (i32, i32) {
    %c0_i32 = arith.constant 0 : i32
    %c0_i32_0 = arith.constant 0 : i32
    return %arg0, %c0_i32 : i32, i32
  }
}

</mosaic_0001>

<llo_original>
// kernel: lr_classification_forward.1
$region0: #{lr_classification_forward.1}
  #allocation0 [shape = 'u32[]', space=smem, size = 0x4, offset = 0x4, fixed_abs, tag = 'smem constant byte address 0x4 - core index']
  #allocation1 [shape = 'u32[144,128]{1,0:T(1,128)}', space=vmem, size = 0x12000, scoped, tag = 'internal scratch']
  #allocation2 [shape = 'f32[1,1]{1,0:T(1,128)S(6)}', space=smem, size = 0x200, scoped, tag = 'scoped memory for lr_classification_forward.1']
  %s0 = inlined_call_operand.vmem [shape: bf16[256,32], index: 0, kind: input, shape index: {}]
  %s1 = inlined_call_operand.vmem [shape: bf16[32,64], index: 1, kind: input, shape index: {}]
  %s2 = inlined_call_operand.vmem [shape: f32[1,64], index: 2, kind: input, shape index: {}]
  %s3 = inlined_call_operand.vmem [shape: bf16[64,32], index: 3, kind: input, shape index: {}]
  %s4 = inlined_call_operand.vmem [shape: f32[1,32], index: 4, kind: input, shape index: {}]
  %s5 = inlined_call_operand.vmem [shape: f32[1,32], index: 5, kind: input, shape index: {}]
  %s6 = inlined_call_operand.<no memory space> [shape: f32[1,1], index: 6, kind: input, shape index: {}]
  %s7 = inlined_call_operand.vmem [shape: f32[256,1], index: 7, kind: output, shape index: {}]
  %s8 = sld [smem:[#allocation0]]
  $region61: #{lr_classification_forward.1} parent=0
    _
  %s10 = ssub.s32 1, %s8
  %s11 = scalar_select 0, %s10, %s8
  %12 = sst [smem:[#allocation2]] %s6
  loop: start=0, step=1, limit=4
  $region2: #{lr_classification_forward.1} parent=0 // loop_pre_header
    _
  $region3: #{lr_classification_forward.1} parent=0 // loop_header
    %s14 = sphi 0, %s18
    %p15 = scmp.ge.s32.totalorder %s14, 4
    %s24 = sphi 0, %s26
    %s27 = sphi 0, %s24
    %s28 = sphi 0, %s27
    %s44 = sphi 0, %s28
    %s48 = sphi 0, %s48
    %s50 = sphi 0, %s48
    %s51 = sphi 0, %s50
    %s65 = sphi 0, %s51
    %s69 = sphi 0, %s69
    %s71 = sphi 0, %s69
    %s72 = sphi 0, %s71
    %s86 = sphi 0, %s72
    %s90 = sphi 0, %s90
    %s92 = sphi 0, %s90
    %s93 = sphi 0, %s92
    %s107 = sphi 0, %s93
    %s111 = sphi 0, %s111
    %s113 = sphi 0, %s111
    %s114 = sphi 0, %s113
    %s128 = sphi 0, %s114
    %s132 = sphi 0, %s132
    %s134 = sphi 0, %s132
    %s135 = sphi 0, %s134
    %s149 = sphi 0, %s135
    %s153 = sphi 0, %s153
    %s155 = sphi 0, %s153
    %s156 = sphi 0, %s155
    %s170 = sphi 0, %s156
    %s176 = sphi 0, %s178
    %s179 = sphi 0, %s176
    %s180 = sphi 0, %s179
    %s196 = sphi 0, %s180
  $region4: #{lr_classification_forward.1} parent=0 // loop_header_branch
    %17 = sbr.rel (%p15) target = $region8
  $region5: #{lr_classification_forward.1} parent=0 // loop_body
    %s19 = ssub.s32 %s14, 1
    %s20 = ssub.s32 %s14, 2
    %s21 = sadd.s32 %s14, 1
    %s22 = ssub.s32 %s14, %s21
    %p23 = scmp.eq.s32.totalorder %s22, 0
    %s25 = sadd.s32 %s24, 1
    %s26 = scalar_select %p23, %s24, %s25
    %p29 = pneg %p23
    %p30 = scmp.eq.s32.totalorder %s14, 1
    %p31 = por %p29, %p30
    %p32 = scmp.ne.s32.totalorder %s24, %s27
    %p33 = scmp.eq.s32.totalorder %s14, 0
    %p34 = por %p32, %p33
    %p35 = scmp.ne.s32.totalorder %s24, %s27
    %p36 = scmp.eq.s32.totalorder %s19, 1
    %p37 = por %p35, %p36
    %p38 = scmp.ne.s32.totalorder %s27, %s28
    %p39 = scmp.eq.s32.totalorder %s19, 0
    %p40 = por %p38, %p39
    %p41 = scmp.ne.s32.totalorder %s27, %s28
    %p42 = scmp.eq.s32.totalorder %s20, 1
    %p43 = por %p41, %p42
    %p45 = scmp.ne.s32.totalorder %s28, %s44
    %p46 = scmp.eq.s32.totalorder %s20, 0
    %p47 = por %p45, %p46
    %s49 = sadd.s32 %s48, 1
    %p52 = scmp.eq.s32.totalorder %s14, 1
    %p53 = scmp.ne.s32.totalorder %s48, %s50
    %p54 = scmp.eq.s32.totalorder %s14, 0
    %p55 = por %p53, %p54
    %p56 = scmp.ne.s32.totalorder %s48, %s50
    %p57 = scmp.eq.s32.totalorder %s19, 1
    %p58 = por %p56, %p57
    %p59 = scmp.ne.s32.totalorder %s50, %s51
    %p60 = scmp.eq.s32.totalorder %s19, 0
    %p61 = por %p59, %p60
    %p62 = scmp.ne.s32.totalorder %s50, %s51
    %p63 = scmp.eq.s32.totalorder %s20, 1
    %p64 = por %p62, %p63
    %p66 = scmp.ne.s32.totalorder %s51, %s65
    %p67 = scmp.eq.s32.totalorder %s20, 0
    %p68 = por %p66, %p67
    %s70 = sadd.s32 %s69, 1
    %p73 = scmp.eq.s32.totalorder %s14, 1
    %p74 = scmp.ne.s32.totalorder %s69, %s71
    %p75 = scmp.eq.s32.totalorder %s14, 0
    %p76 = por %p74, %p75
    %p77 = scmp.ne.s32.totalorder %s69, %s71
    %p78 = scmp.eq.s32.totalorder %s19, 1
    %p79 = por %p77, %p78
    %p80 = scmp.ne.s32.totalorder %s71, %s72
    %p81 = scmp.eq.s32.totalorder %s19, 0
    %p82 = por %p80, %p81
    %p83 = scmp.ne.s32.totalorder %s71, %s72
    %p84 = scmp.eq.s32.totalorder %s20, 1
    %p85 = por %p83, %p84
    %p87 = scmp.ne.s32.totalorder %s72, %s86
    %p88 = scmp.eq.s32.totalorder %s20, 0
    %p89 = por %p87, %p88
    %s91 = sadd.s32 %s90, 1
    %p94 = scmp.eq.s32.totalorder %s14, 1
    %p95 = scmp.ne.s32.totalorder %s90, %s92
    %p96 = scmp.eq.s32.totalorder %s14, 0
    %p97 = por %p95, %p96
    %p98 = scmp.ne.s32.totalorder %s90, %s92
    %p99 = scmp.eq.s32.totalorder %s19, 1
    %p100 = por %p98, %p99
    %p101 = scmp.ne.s32.totalorder %s92, %s93
    %p102 = scmp.eq.s32.totalorder %s19, 0
    %p103 = por %p101, %p102
    %p104 = scmp.ne.s32.totalorder %s92, %s93
    %p105 = scmp.eq.s32.totalorder %s20, 1
    %p106 = por %p104, %p105
    %p108 = scmp.ne.s32.totalorder %s93, %s107
    %p109 = scmp.eq.s32.totalorder %s20, 0
    %p110 = por %p108, %p109
    %s112 = sadd.s32 %s111, 1
    %p115 = scmp.eq.s32.totalorder %s14, 1
    %p116 = scmp.ne.s32.totalorder %s111, %s113
    %p117 = scmp.eq.s32.totalorder %s14, 0
    %p118 = por %p116, %p117
    %p119 = scmp.ne.s32.totalorder %s111, %s113
    %p120 = scmp.eq.s32.totalorder %s19, 1
    %p121 = por %p119, %p120
    %p122 = scmp.ne.s32.totalorder %s113, %s114
    %p123 = scmp.eq.s32.totalorder %s19, 0
    %p124 = por %p122, %p123
    %p125 = scmp.ne.s32.totalorder %s113, %s114
    %p126 = scmp.eq.s32.totalorder %s20, 1
    %p127 = por %p125, %p126
    %p129 = scmp.ne.s32.totalorder %s114, %s128
    %p130 = scmp.eq.s32.totalorder %s20, 0
    %p131 = por %p129, %p130
    %s133 = sadd.s32 %s132, 1
    %p136 = scmp.eq.s32.totalorder %s14, 1
    %p137 = scmp.ne.s32.totalorder %s132, %s134
    %p138 = scmp.eq.s32.totalorder %s14, 0
    %p139 = por %p137, %p138
    %p140 = scmp.ne.s32.totalorder %s132, %s134
    %p141 = scmp.eq.s32.totalorder %s19, 1
    %p142 = por %p140, %p141
    %p143 = scmp.ne.s32.totalorder %s134, %s135
    %p144 = scmp.eq.s32.totalorder %s19, 0
    %p145 = por %p143, %p144
    %p146 = scmp.ne.s32.totalorder %s134, %s135
    %p147 = scmp.eq.s32.totalorder %s20, 1
    %p148 = por %p146, %p147
    %p150 = scmp.ne.s32.totalorder %s135, %s149
    %p151 = scmp.eq.s32.totalorder %s20, 0
    %p152 = por %p150, %p151
    %s154 = sadd.s32 %s153, 1
    %p157 = scmp.eq.s32.totalorder %s14, 1
    %p158 = scmp.ne.s32.totalorder %s153, %s155
    %p159 = scmp.eq.s32.totalorder %s14, 0
    %p160 = por %p158, %p159
    %p161 = scmp.ne.s32.totalorder %s153, %s155
    %p162 = scmp.eq.s32.totalorder %s19, 1
    %p163 = por %p161, %p162
    %p164 = scmp.ne.s32.totalorder %s155, %s156
    %p165 = scmp.eq.s32.totalorder %s19, 0
    %p166 = por %p164, %p165
    %p167 = scmp.ne.s32.totalorder %s155, %s156
    %p168 = scmp.eq.s32.totalorder %s20, 1
    %p169 = por %p167, %p168
    %p171 = scmp.ne.s32.totalorder %s156, %s170
    %p172 = scmp.eq.s32.totalorder %s20, 0
    %p173 = por %p171, %p172
    %s174 = ssub.s32 %s14, %s21
    %p175 = scmp.eq.s32.totalorder %s174, 0
    %s177 = sadd.s32 %s176, 1
    %s178 = scalar_select %p175, %s176, %s177
    %p181 = pneg %p175
    %p182 = scmp.eq.s32.totalorder %s14, 1
    %p183 = por %p181, %p182
    %p184 = scmp.ne.s32.totalorder %s176, %s179
    %p185 = scmp.eq.s32.totalorder %s14, 0
    %p186 = por %p184, %p185
    %p187 = scmp.ne.s32.totalorder %s176, %s179
    %p188 = scmp.eq.s32.totalorder %s19, 1
    %p189 = por %p187, %p188
    %p190 = scmp.ne.s32.totalorder %s179, %s180
    %p191 = scmp.eq.s32.totalorder %s19, 0
    %p192 = por %p190, %p191
    %p193 = scmp.ne.s32.totalorder %s179, %s180
    %p194 = scmp.eq.s32.totalorder %s20, 1
    %p195 = por %p193, %p194
    %p197 = scmp.ne.s32.totalorder %s180, %s196
    %p198 = scmp.eq.s32.totalorder %s20, 0
    %p199 = por %p197, %p198
    %p200 = scmp.le.s32.totalorder 1, %s14
    %p201 = scmp.lt.s32.totalorder %s14, 3
    %p202 = pnand %p200, %p201
    %p203 = pneg %p202
    // Predicated region
    $region9: #{lr_classification_forward.1} parent=5 // pred_check
      _
    $region10: #{lr_classification_forward.1} parent=5 // pred_check_branch
      %205 = sbr.rel (%p202) target = $region12
    $region11: #{lr_classification_forward.1} parent=5 // pred_region
      %s206 = ssub.s32 %s14, 1
      // Predicated region
      $region13: #{lr_classification_forward.1} parent=11 // pred_check
        %p207 = pneg %p61
      $region14: #{lr_classification_forward.1} parent=11 // pred_check_branch
        %209 = sbr.rel (%p207) target = $region16
      $region15: #{lr_classification_forward.1} parent=11 // pred_region
        _
      $region16: #{lr_classification_forward.1} parent=11 // pred_fallthru
        _
      // Predicated region
      $region17: #{lr_classification_forward.1} parent=11 // pred_check
        %p210 = pneg %p82
      $region18: #{lr_classification_forward.1} parent=11 // pred_check_branch
        %212 = sbr.rel (%p210) target = $region20
      $region19: #{lr_classification_forward.1} parent=11 // pred_region
        _
      $region20: #{lr_classification_forward.1} parent=11 // pred_fallthru
        _
      // Predicated region
      $region21: #{lr_classification_forward.1} parent=11 // pred_check
        %p213 = pneg %p103
      $region22: #{lr_classification_forward.1} parent=11 // pred_check_branch
        %215 = sbr.rel (%p213) target = $region24
      $region23: #{lr_classification_forward.1} parent=11 // pred_region
        _
      $region24: #{lr_classification_forward.1} parent=11 // pred_fallthru
        _
      // Predicated region
      $region25: #{lr_classification_forward.1} parent=11 // pred_check
        %p216 = pneg %p124
      $region26: #{lr_classification_forward.1} parent=11 // pred_check_branch
        %218 = sbr.rel (%p216) target = $region28
      $region27: #{lr_classification_forward.1} parent=11 // pred_region
        _
      $region28: #{lr_classification_forward.1} parent=11 // pred_fallthru
        _
      // Predicated region
      $region29: #{lr_classification_forward.1} parent=11 // pred_check
        %p219 = pneg %p145
      $region30: #{lr_classification_forward.1} parent=11 // pred_check_branch
        %221 = sbr.rel (%p219) target = $region32
      $region31: #{lr_classification_forward.1} parent=11 // pred_region
        _
      $region32: #{lr_classification_forward.1} parent=11 // pred_fallthru
        _
      // Predicated region
      $region33: #{lr_classification_forward.1} parent=11 // pred_check
        %p222 = pneg %p166
      $region34: #{lr_classification_forward.1} parent=11 // pred_check_branch
        %224 = sbr.rel (%p222) target = $region36
      $region35: #{lr_classification_forward.1} parent=11 // pred_region
        _
      $region36: #{lr_classification_forward.1} parent=11 // pred_fallthru
        _
    $region12: #{lr_classification_forward.1} parent=5 // pred_fallthru
      _
    %p225 = scmp.lt.s32.totalorder %s14, 2
    // Predicated region
    $region37: #{lr_classification_forward.1} parent=5 // pred_check
      %p226 = pneg %p225
    $region38: #{lr_classification_forward.1} parent=5 // pred_check_branch
      %228 = sbr.rel (%p226) target = $region40
    $region39: #{lr_classification_forward.1} parent=5 // pred_region
      // Predicated region
      $region41: #{lr_classification_forward.1} parent=39 // pred_check
        %p229 = pneg %p34
      $region42: #{lr_classification_forward.1} parent=39 // pred_check_branch
        %231 = sbr.rel (%p229) target = $region44
      $region43: #{lr_classification_forward.1} parent=39 // pred_region
        %s232 = smul.u32 16, %s14
        %p233 = scmp.lt.s32.totalorder %s232, 31
        %s234 = scalar_select %p233, %s232, 31
        %s235 = smul.addr %s234, 4
        %s236 = scalar_lea.vmem %s0, %s235
        %s237 = smul.u32 16, %s14
      $region44: #{lr_classification_forward.1} parent=39 // pred_fallthru
        _
    $region40: #{lr_classification_forward.1} parent=5 // pred_fallthru
      _
    %p238 = scmp.le.s32.totalorder 1, %s14
    %p239 = scmp.lt.s32.totalorder %s14, 3
    %p240 = pnand %p238, %p239
    %p241 = pneg %p240
    // Predicated region
    $region45: #{lr_classification_forward.1} parent=5 // pred_check
      _
    $region46: #{lr_classification_forward.1} parent=5 // pred_check_branch
      %243 = sbr.rel (%p240) target = $region48
    $region47: #{lr_classification_forward.1} parent=5 // pred_region
      %s244 = ssub.s32 %s14, 1
      %s245 = smul.u32 16, %s19
      %p246 = scmp.lt.s32.totalorder %s245, 31
      %s247 = scalar_select %p246, %s245, 31
      %s248 = smul.addr %s247, 4
      %s249 = scalar_lea.vmem %s0, %s248
      %p250 = pneg %p40
      %p251 = pneg %p37
      %p252 = pneg %p61
      %p253 = pneg %p58
      %p254 = pneg %p82
      %p255 = pneg %p79
      %p256 = pneg %p103
      %p257 = pneg %p100
      %p258 = pneg %p124
      %p259 = pneg %p121
      %p260 = pneg %p145
      %p261 = pneg %p142
      %p262 = pneg %p166
      %p263 = pneg %p163
      %p264 = pneg %p192
      %p265 = pneg %p189
      %s266 = smul.u32 16, %s19
      %p267 = scmp.lt.s32.totalorder %s266, 31
      %s268 = scalar_select %p267, %s266, 31
      %s269 = smul.addr %s268, 8
      %s270 = scalar_lea.vmem %s7, %s269
      %s271 = smul.u32 16, %s19
      %p272 = scmp.lt.s32.totalorder %s271, 31
      %s273 = scalar_select %p272, %s271, 31
      %s274 = smul.addr %s273, 4
      %s275 = scalar_lea.vmem %s0, %s274
      %s276 = smul.u32 16, %s19
      %s277 = smul.u32 16, %s19
      %p278 = scmp.lt.s32.totalorder %s277, 31
      %s279 = scalar_select %p278, %s277, 31
      %s280 = smul.addr %s279, 8
      %s281 = scalar_lea.vmem %s7, %s280
      %s282 = smul.u32 16, %s19
      %v284 = vld [vmem:[%s275] sm:$0xf]
      %v285 = vld [vmem:[%s275 + $0x4] sm:$0xf]
      %v286 = vld [vmem:[%s275 + $0x8] sm:$0xf]
      %v287 = vld [vmem:[%s275 + $0xc] sm:$0xf]
      %v288 = vld [vmem:[%s275 + $0x10] sm:$0xf]
      %v289 = vld [vmem:[%s275 + $0x14] sm:$0xf]
      %v290 = vld [vmem:[%s275 + $0x18] sm:$0xf]
      %v291 = vld [vmem:[%s275 + $0x1c] sm:$0xf]
      %v292 = vld [vmem:[%s275 + $0x20] sm:$0xf]
      %v293 = vld [vmem:[%s275 + $0x24] sm:$0xf]
      %v294 = vld [vmem:[%s275 + $0x28] sm:$0xf]
      %v295 = vld [vmem:[%s275 + $0x2c] sm:$0xf]
      %v296 = vld [vmem:[%s275 + $0x30] sm:$0xf]
      %v297 = vld [vmem:[%s275 + $0x34] sm:$0xf]
      %v298 = vld [vmem:[%s275 + $0x38] sm:$0xf]
      %v299 = vld [vmem:[%s275 + $0x3c] sm:$0xf]
      %v300 = vld [vmem:[%s1] sm:$0xf]
      %v301 = vld [vmem:[%s1 + $0x4] sm:$0xf]
      %v302 = vld [vmem:[%s1 + $0x8] sm:$0xf]
      %v303 = vld [vmem:[%s1 + $0xc] sm:$0xf]
      %v304 = vld [vmem:[%s2] sm:$0x1]
      %v306 = vlaneseq
      %v307 = vshrl.u32 %v306, 7
      %v308 = vsub.s32 0, %v307
      %v309 = vrot.slane %v304, %v308
      %v327 = vunpack.c.l.b16 %v284
      %v328 = vunpack.c.l.b16 %v285
      %v329 = vunpack.c.l.b16 %v286
      %v330 = vunpack.c.l.b16 %v287
      %v331 = vunpack.c.l.b16 %v288
      %v332 = vunpack.c.l.b16 %v289
      %v333 = vunpack.c.l.b16 %v290
      %v334 = vunpack.c.l.b16 %v291
      %v335 = vunpack.c.l.b16 %v292
      %v336 = vunpack.c.l.b16 %v293
      %v337 = vunpack.c.l.b16 %v294
      %v338 = vunpack.c.l.b16 %v295
      %v339 = vunpack.c.l.b16 %v296
      %v340 = vunpack.c.l.b16 %v297
      %v341 = vunpack.c.l.b16 %v298
      %v342 = vunpack.c.l.b16 %v299
      %v343 = vpack.c.b16 %v328, %v327
      %v344 = vpack.c.b16 %v330, %v329
      %v345 = vpack.c.b16 %v332, %v331
      %v346 = vpack.c.b16 %v334, %v333
      %v347 = vpack.c.b16 %v336, %v335
      %v348 = vpack.c.b16 %v338, %v337
      %v349 = vpack.c.b16 %v340, %v339
      %v350 = vpack.c.b16 %v342, %v341
      %v355 = vunpack.c.l.b16 %v300
      %v356 = vunpack.c.l.b16 %v301
      %v357 = vunpack.c.l.b16 %v302
      %v358 = vunpack.c.l.b16 %v303
      %v359 = vpack.c.b16 %v356, %v355
      %v360 = vpack.c.b16 %v358, %v357
      %vm363 = vcmask 261120
      %v365 = vsel %vm363, %v343, 0
      %v368 = vsel %vm363, %v344, 0
      %v371 = vsel %vm363, %v345, 0
      %v374 = vsel %vm363, %v346, 0
      %v377 = vsel %vm363, %v347, 0
      %v380 = vsel %vm363, %v348, 0
      %v383 = vsel %vm363, %v349, 0
      %v386 = vsel %vm363, %v350, 0
      %388 = vmatprep.subr.bf16.mxu0 0
      %389 = vmatpush1.bf16.msra.mxu0 %v359
      %390 = vmatprep.subr.bf16.mxu0 0
      %391 = vmatpush1.bf16.msra.mxu0 %v360
      %392 = vmatprep.subr.bf16.mxu0 0
      %393 = vmatpush1.bf16.msra.mxu0 0
      %394 = vmatprep.subr.bf16.mxu0 0
      %395 = vmatpush1.bf16.msra.mxu0 0
      %396 = vmatprep.subr.bf16.mxu0 0
      %397 = vmatpush1.bf16.msra.mxu0 0
      %398 = vmatprep.subr.bf16.mxu0 0
      %399 = vmatpush1.bf16.msra.mxu0 0
      %400 = vmatprep.subr.bf16.mxu0 0
      %401 = vmatpush1.bf16.msra.mxu0 0
      %402 = vmatprep.subr.bf16.mxu0 0
      %403 = vmatpush1.bf16.msra.mxu0 0
      %404 = vmatprep.subr.bf16.mxu0 0
      %405 = vmatpush1.bf16.msra.mxu0 0
      %406 = vmatprep.subr.bf16.mxu0 0
      %407 = vmatpush1.bf16.msra.mxu0 0
      %408 = vmatprep.subr.bf16.mxu0 0
      %409 = vmatpush1.bf16.msra.mxu0 0
      %410 = vmatprep.subr.bf16.mxu0 0
      %411 = vmatpush1.bf16.msra.mxu0 0
      %412 = vmatprep.subr.bf16.mxu0 0
      %413 = vmatpush1.bf16.msra.mxu0 0
      %414 = vmatprep.subr.bf16.mxu0 0
      %415 = vmatpush1.bf16.msra.mxu0 0
      %416 = vmatprep.subr.bf16.mxu0 0
      %417 = vmatpush1.bf16.msra.mxu0 0
      %418 = vmatprep.subr.bf16.mxu0 0
      %419 = vmatpush1.bf16.msra.mxu0 0
      %420 = vmatprep.mubr.bf16.mxu0 0
      %421 = vmatmul.mubr.bf16.gmra.mrb[0].mxu0 %v365
      %v422 = vpop.f32.mrb[0].mxu0
      %v423 = vadd.f32 %v309, %v422
      %v424 = vpop.f32.mrb[0].mxu0
      %v425 = vpop.f32.mrb[0].mxu0
      %v426 = vadd.f32 %v309, %v425
      %v427 = vpop.f32.mrb[0].mxu0
      %428 = vmatprep.mubr.bf16.mxu0 0
      %429 = vmatmul.mubr.bf16.gmra.mrb[0].mxu0 %v368
      %v430 = vpop.f32.mrb[0].mxu0
      %v431 = vadd.f32 %v309, %v430
      %v432 = vpop.f32.mrb[0].mxu0
      %v433 = vpop.f32.mrb[0].mxu0
      %v434 = vadd.f32 %v309, %v433
      %v435 = vpop.f32.mrb[0].mxu0
      %436 = vmatprep.mubr.bf16.mxu0 0
      %437 = vmatmul.mubr.bf16.gmra.mrb[0].mxu0 %v371
      %v438 = vpop.f32.mrb[0].mxu0
      %v439 = vadd.f32 %v309, %v438
      %v440 = vpop.f32.mrb[0].mxu0
      %v441 = vpop.f32.mrb[0].mxu0
      %v442 = vadd.f32 %v309, %v441
      %v443 = vpop.f32.mrb[0].mxu0
      %444 = vmatprep.mubr.bf16.mxu0 0
      %445 = vmatmul.mubr.bf16.gmra.mrb[0].mxu0 %v374
      %v446 = vpop.f32.mrb[0].mxu0
      %v447 = vadd.f32 %v309, %v446
      %v448 = vpop.f32.mrb[0].mxu0
      %v449 = vpop.f32.mrb[0].mxu0
      %v450 = vadd.f32 %v309, %v449
      %v451 = vpop.f32.mrb[0].mxu0
      %452 = vmatprep.mubr.bf16.mxu0 0
      %453 = vmatmul.mubr.bf16.gmra.mrb[0].mxu0 %v377
      %v454 = vpop.f32.mrb[0].mxu0
      %v455 = vadd.f32 %v309, %v454
      %v456 = vpop.f32.mrb[0].mxu0
      %v457 = vpop.f32.mrb[0].mxu0
      %v458 = vadd.f32 %v309, %v457
      %v459 = vpop.f32.mrb[0].mxu0
      %460 = vmatprep.mubr.bf16.mxu0 0
      %461 = vmatmul.mubr.bf16.gmra.mrb[0].mxu0 %v380
      %v462 = vpop.f32.mrb[0].mxu0
      %v463 = vadd.f32 %v309, %v462
      %v464 = vpop.f32.mrb[0].mxu0
      %v465 = vpop.f32.mrb[0].mxu0
      %v466 = vadd.f32 %v309, %v465
      %v467 = vpop.f32.mrb[0].mxu0
      %468 = vmatprep.mubr.bf16.mxu0 0
      %469 = vmatmul.mubr.bf16.gmra.mrb[0].mxu0 %v383
      %v470 = vpop.f32.mrb[0].mxu0
      %v471 = vadd.f32 %v309, %v470
      %v472 = vpop.f32.mrb[0].mxu0
      %v473 = vpop.f32.mrb[0].mxu0
      %v474 = vadd.f32 %v309, %v473
      %v475 = vpop.f32.mrb[0].mxu0
      %476 = vmatprep.mubr.bf16.mxu0 0
      %477 = vmatmul.mubr.bf16.gmra.mrb[0].mxu0 %v386
      %v478 = vpop.f32.mrb[0].mxu0
      %v479 = vadd.f32 %v309, %v478
      %v480 = vpop.f32.mrb[0].mxu0
      %v481 = vpop.f32.mrb[0].mxu0
      %v482 = vadd.f32 %v309, %v481
      %v483 = vpop.f32.mrb[0].mxu0
      %484 = vdwg.mxu0
      %v485 = vmax.f32 %v423, 0.0
      %v486 = vmax.f32 %v426, 0.0
      %v487 = vmax.f32 %v431, 0.0
      %v488 = vmax.f32 %v434, 0.0
      %v489 = vmax.f32 %v439, 0.0
      %v490 = vmax.f32 %v442, 0.0
      %v491 = vmax.f32 %v447, 0.0
      %v492 = vmax.f32 %v450, 0.0
      %v493 = vmax.f32 %v455, 0.0
      %v494 = vmax.f32 %v458, 0.0
      %v495 = vmax.f32 %v463, 0.0
      %v496 = vmax.f32 %v466, 0.0
      %v497 = vmax.f32 %v471, 0.0
      %v498 = vmax.f32 %v474, 0.0
      %v499 = vmax.f32 %v479, 0.0
      %v500 = vmax.f32 %v482, 0.0
      %v501 = vpack.c.bf16 %v486, %v485
      %v502 = vpack.c.bf16 %v488, %v487
      %v503 = vpack.c.bf16 %v490, %v489
      %v504 = vpack.c.bf16 %v492, %v491
      %v505 = vpack.c.bf16 %v494, %v493
      %v506 = vpack.c.bf16 %v496, %v495
      %v507 = vpack.c.bf16 %v498, %v497
      %v508 = vpack.c.bf16 %v500, %v499
      %v509 = vld [vmem:[%s3] sm:$0xf]
      %v510 = vld [vmem:[%s3 + $0x4] sm:$0xf]
      %v511 = vld [vmem:[%s3 + $0x8] sm:$0xf]
      %v512 = vld [vmem:[%s3 + $0xc] sm:$0xf]
      %v513 = vld [vmem:[%s3 + $0x10] sm:$0xf]
      %v514 = vld [vmem:[%s3 + $0x14] sm:$0xf]
      %v515 = vld [vmem:[%s3 + $0x18] sm:$0xf]
      %v516 = vld [vmem:[%s3 + $0x1c] sm:$0xf]
      %v517 = vld [vmem:[%s4] sm:$0x1]
      %v519 = vlaneseq
      %v520 = vshrl.u32 %v519, 7
      %v521 = vsub.s32 0, %v520
      %v522 = vrot.slane %v517, %v521
      %v532 = vunpack.c.l.b16 %v509
      %v533 = vunpack.c.l.b16 %v510
      %v534 = vunpack.c.l.b16 %v511
      %v535 = vunpack.c.l.b16 %v512
      %v536 = vunpack.c.l.b16 %v513
      %v537 = vunpack.c.l.b16 %v514
      %v538 = vunpack.c.l.b16 %v515
      %v539 = vunpack.c.l.b16 %v516
      %v540 = vpack.c.b16 %v533, %v532
      %v541 = vpack.c.b16 %v535, %v534
      %v542 = vpack.c.b16 %v537, %v536
      %v543 = vpack.c.b16 %v539, %v538
      %vm548 = vcmask 523264
      %v550 = vsel %vm548, %v501, 0
      %v553 = vsel %vm548, %v502, 0
      %v556 = vsel %vm548, %v503, 0
      %v559 = vsel %vm548, %v504, 0
      %v562 = vsel %vm548, %v505, 0
      %v565 = vsel %vm548, %v506, 0
      %v568 = vsel %vm548, %v507, 0
      %v571 = vsel %vm548, %v508, 0
      %573 = vmatprep.subr.bf16.mxu0 0
      %574 = vmatpush1.bf16.msra.mxu0 %v540
      %575 = vmatprep.subr.bf16.mxu0 0
      %576 = vmatpush1.bf16.msra.mxu0 %v541
      %577 = vmatprep.subr.bf16.mxu0 0
      %578 = vmatpush1.bf16.msra.mxu0 %v542
      %579 = vmatprep.subr.bf16.mxu0 0
      %580 = vmatpush1.bf16.msra.mxu0 %v543
      %581 = vmatprep.subr.bf16.mxu0 0
      %582 = vmatpush1.bf16.msra.mxu0 0
      %583 = vmatprep.subr.bf16.mxu0 0
      %584 = vmatpush1.bf16.msra.mxu0 0
      %585 = vmatprep.subr.bf16.mxu0 0
      %586 = vmatpush1.bf16.msra.mxu0 0
      %587 = vmatprep.subr.bf16.mxu0 0
      %588 = vmatpush1.bf16.msra.mxu0 0
      %589 = vmatprep.subr.bf16.mxu0 0
      %590 = vmatpush1.bf16.msra.mxu0 0
      %591 = vmatprep.subr.bf16.mxu0 0
      %592 = vmatpush1.bf16.msra.mxu0 0
      %593 = vmatprep.subr.bf16.mxu0 0
      %594 = vmatpush1.bf16.msra.mxu0 0
      %595 = vmatprep.subr.bf16.mxu0 0
      %596 = vmatpush1.bf16.msra.mxu0 0
      %597 = vmatprep.subr.bf16.mxu0 0
      %598 = vmatpush1.bf16.msra.mxu0 0
      %599 = vmatprep.subr.bf16.mxu0 0
      %600 = vmatpush1.bf16.msra.mxu0 0
      %601 = vmatprep.subr.bf16.mxu0 0
      %602 = vmatpush1.bf16.msra.mxu0 0
      %603 = vmatprep.subr.bf16.mxu0 0
      %604 = vmatpush1.bf16.msra.mxu0 0
      %605 = vmatprep.mubr.bf16.mxu0 0
      %606 = vmatmul.mubr.bf16.gmra.mrb[0].mxu0 %v550
      %v607 = vpop.f32.mrb[0].mxu0
      %v608 = vadd.f32 %v522, %v607
      %v609 = vpop.f32.mrb[0].mxu0
      %v610 = vpop.f32.mrb[0].mxu0
      %v611 = vadd.f32 %v522, %v610
      %v612 = vpop.f32.mrb[0].mxu0
      %613 = vmatprep.mubr.bf16.mxu0 0
      %614 = vmatmul.mubr.bf16.gmra.mrb[0].mxu0 %v553
      %v615 = vpop.f32.mrb[0].mxu0
      %v616 = vadd.f32 %v522, %v615
      %v617 = vpop.f32.mrb[0].mxu0
      %v618 = vpop.f32.mrb[0].mxu0
      %v619 = vadd.f32 %v522, %v618
      %v620 = vpop.f32.mrb[0].mxu0
      %621 = vmatprep.mubr.bf16.mxu0 0
      %622 = vmatmul.mubr.bf16.gmra.mrb[0].mxu0 %v556
      %v623 = vpop.f32.mrb[0].mxu0
      %v624 = vadd.f32 %v522, %v623
      %v625 = vpop.f32.mrb[0].mxu0
      %v626 = vpop.f32.mrb[0].mxu0
      %v627 = vadd.f32 %v522, %v626
      %v628 = vpop.f32.mrb[0].mxu0
      %629 = vmatprep.mubr.bf16.mxu0 0
      %630 = vmatmul.mubr.bf16.gmra.mrb[0].mxu0 %v559
      %v631 = vpop.f32.mrb[0].mxu0
      %v632 = vadd.f32 %v522, %v631
      %v633 = vpop.f32.mrb[0].mxu0
      %v634 = vpop.f32.mrb[0].mxu0
      %v635 = vadd.f32 %v522, %v634
      %v636 = vpop.f32.mrb[0].mxu0
      %637 = vmatprep.mubr.bf16.mxu0 0
      %638 = vmatmul.mubr.bf16.gmra.mrb[0].mxu0 %v562
      %v639 = vpop.f32.mrb[0].mxu0
      %v640 = vadd.f32 %v522, %v639
      %v641 = vpop.f32.mrb[0].mxu0
      %v642 = vpop.f32.mrb[0].mxu0
      %v643 = vadd.f32 %v522, %v642
      %v644 = vpop.f32.mrb[0].mxu0
      %645 = vmatprep.mubr.bf16.mxu0 0
      %646 = vmatmul.mubr.bf16.gmra.mrb[0].mxu0 %v565
      %v647 = vpop.f32.mrb[0].mxu0
      %v648 = vadd.f32 %v522, %v647
      %v649 = vpop.f32.mrb[0].mxu0
      %v650 = vpop.f32.mrb[0].mxu0
      %v651 = vadd.f32 %v522, %v650
      %v652 = vpop.f32.mrb[0].mxu0
      %653 = vmatprep.mubr.bf16.mxu0 0
      %654 = vmatmul.mubr.bf16.gmra.mrb[0].mxu0 %v568
      %v655 = vpop.f32.mrb[0].mxu0
      %v656 = vadd.f32 %v522, %v655
      %v657 = vpop.f32.mrb[0].mxu0
      %v658 = vpop.f32.mrb[0].mxu0
      %v659 = vadd.f32 %v522, %v658
      %v660 = vpop.f32.mrb[0].mxu0
      %661 = vmatprep.mubr.bf16.mxu0 0
      %662 = vmatmul.mubr.bf16.gmra.mrb[0].mxu0 %v571
      %v663 = vpop.f32.mrb[0].mxu0
      %v664 = vadd.f32 %v522, %v663
      %v665 = vpop.f32.mrb[0].mxu0
      %v666 = vpop.f32.mrb[0].mxu0
      %v667 = vadd.f32 %v522, %v666
      %v668 = vpop.f32.mrb[0].mxu0
      %669 = vdwg.mxu0
      %v670 = vmax.f32 %v608, 0.0
      %v671 = vmax.f32 %v611, 0.0
      %v672 = vmax.f32 %v616, 0.0
      %v673 = vmax.f32 %v619, 0.0
      %v674 = vmax.f32 %v624, 0.0
      %v675 = vmax.f32 %v627, 0.0
      %v676 = vmax.f32 %v632, 0.0
      %v677 = vmax.f32 %v635, 0.0
      %v678 = vmax.f32 %v640, 0.0
      %v679 = vmax.f32 %v643, 0.0
      %v680 = vmax.f32 %v648, 0.0
      %v681 = vmax.f32 %v651, 0.0
      %v682 = vmax.f32 %v656, 0.0
      %v683 = vmax.f32 %v659, 0.0
      %v684 = vmax.f32 %v664, 0.0
      %v685 = vmax.f32 %v667, 0.0
      %v686 = vld [vmem:[%s5] sm:$0x1]
      %v688 = vlaneseq
      %v689 = vshrl.u32 %v688, 7
      %v690 = vsub.s32 0, %v689
      %v691 = vrot.slane %v686, %v690
      %v693 = vmul.f32 %v670, %v691
      %v694 = vmul.f32 %v671, %v691
      %v695 = vmul.f32 %v672, %v691
      %v696 = vmul.f32 %v673, %v691
      %v697 = vmul.f32 %v674, %v691
      %v698 = vmul.f32 %v675, %v691
      %v699 = vmul.f32 %v676, %v691
      %v700 = vmul.f32 %v677, %v691
      %v701 = vmul.f32 %v678, %v691
      %v702 = vmul.f32 %v679, %v691
      %v703 = vmul.f32 %v680, %v691
      %v704 = vmul.f32 %v681, %v691
      %v705 = vmul.f32 %v682, %v691
      %v706 = vmul.f32 %v683, %v691
      %v707 = vmul.f32 %v684, %v691
      %v708 = vmul.f32 %v685, %v691
      %v709 = vsel %vm363, %v693, 0.0
      %710 = vadd.xlane.f32.xlu0 %v709
      %v711 = vpop.xlane.xlu0 %710
      %v712 = vsel %vm363, %v694, 0.0
      %713 = vadd.xlane.f32.xlu0 %v712
      %v714 = vpop.xlane.xlu0 %713
      %v715 = vsel %vm363, %v695, 0.0
      %716 = vadd.xlane.f32.xlu0 %v715
      %v717 = vpop.xlane.xlu0 %716
      %v718 = vsel %vm363, %v696, 0.0
      %719 = vadd.xlane.f32.xlu0 %v718
      %v720 = vpop.xlane.xlu0 %719
      %v721 = vsel %vm363, %v697, 0.0
      %722 = vadd.xlane.f32.xlu0 %v721
      %v723 = vpop.xlane.xlu0 %722
      %v724 = vsel %vm363, %v698, 0.0
      %725 = vadd.xlane.f32.xlu0 %v724
      %v726 = vpop.xlane.xlu0 %725
      %v727 = vsel %vm363, %v699, 0.0
      %728 = vadd.xlane.f32.xlu0 %v727
      %v729 = vpop.xlane.xlu0 %728
      %v730 = vsel %vm363, %v700, 0.0
      %731 = vadd.xlane.f32.xlu0 %v730
      %v732 = vpop.xlane.xlu0 %731
      %v733 = vsel %vm363, %v701, 0.0
      %734 = vadd.xlane.f32.xlu0 %v733
      %v735 = vpop.xlane.xlu0 %734
      %v736 = vsel %vm363, %v702, 0.0
      %737 = vadd.xlane.f32.xlu0 %v736
      %v738 = vpop.xlane.xlu0 %737
      %v739 = vsel %vm363, %v703, 0.0
      %740 = vadd.xlane.f32.xlu0 %v739
      %v741 = vpop.xlane.xlu0 %740
      %v742 = vsel %vm363, %v704, 0.0
      %743 = vadd.xlane.f32.xlu0 %v742
      %v744 = vpop.xlane.xlu0 %743
      %v745 = vsel %vm363, %v705, 0.0
      %746 = vadd.xlane.f32.xlu0 %v745
      %v747 = vpop.xlane.xlu0 %746
      %v748 = vsel %vm363, %v706, 0.0
      %749 = vadd.xlane.f32.xlu0 %v748
      %v750 = vpop.xlane.xlu0 %749
      %v751 = vsel %vm363, %v707, 0.0
      %752 = vadd.xlane.f32.xlu0 %v751
      %v753 = vpop.xlane.xlu0 %752
      %v754 = vsel %vm363, %v708, 0.0
      %755 = vadd.xlane.f32.xlu0 %v754
      %v756 = vpop.xlane.xlu0 %755
      %s757 = sld [smem:[#allocation2]]
      %v758 = vstv %s757
      %v759 = vadd.f32 %v711, %v758
      %v760 = vadd.f32 %v714, %v758
      %v761 = vadd.f32 %v717, %v758
      %v762 = vadd.f32 %v720, %v758
      %v763 = vadd.f32 %v723, %v758
      %v764 = vadd.f32 %v726, %v758
      %v765 = vadd.f32 %v729, %v758
      %v766 = vadd.f32 %v732, %v758
      %v767 = vadd.f32 %v735, %v758
      %v768 = vadd.f32 %v738, %v758
      %v769 = vadd.f32 %v741, %v758
      %v770 = vadd.f32 %v744, %v758
      %v771 = vadd.f32 %v747, %v758
      %v772 = vadd.f32 %v750, %v758
      %v773 = vadd.f32 %v753, %v758
      %v774 = vadd.f32 %v756, %v758
      %v775 = vsub.f32 0.0, %v759
      %v776 = vsub.f32 0.0, %v760
      %v777 = vsub.f32 0.0, %v761
      %v778 = vsub.f32 0.0, %v762
      %v779 = vsub.f32 0.0, %v763
      %v780 = vsub.f32 0.0, %v764
      %v781 = vsub.f32 0.0, %v765
      %v782 = vsub.f32 0.0, %v766
      %v783 = vsub.f32 0.0, %v767
      %v784 = vsub.f32 0.0, %v768
      %v785 = vsub.f32 0.0, %v769
      %v786 = vsub.f32 0.0, %v770
      %v787 = vsub.f32 0.0, %v771
      %v788 = vsub.f32 0.0, %v772
      %v789 = vsub.f32 0.0, %v773
      %v790 = vsub.f32 0.0, %v774
      %v791 = vmul.f32 %v775, 1.442695
      %v792 = vpow.pop %v791
      %v793 = vmul.f32 %v776, 1.442695
      %v794 = vpow.pop %v793
      %v795 = vmul.f32 %v777, 1.442695
      %v796 = vpow.pop %v795
      %v797 = vmul.f32 %v778, 1.442695
      %v798 = vpow.pop %v797
      %v799 = vmul.f32 %v779, 1.442695
      %v800 = vpow.pop %v799
      %v801 = vmul.f32 %v780, 1.442695
      %v802 = vpow.pop %v801
      %v803 = vmul.f32 %v781, 1.442695
      %v804 = vpow.pop %v803
      %v805 = vmul.f32 %v782, 1.442695
      %v806 = vpow.pop %v805
      %v807 = vmul.f32 %v783, 1.442695
      %v808 = vpow.pop %v807
      %v809 = vmul.f32 %v784, 1.442695
      %v810 = vpow.pop %v809
      %v811 = vmul.f32 %v785, 1.442695
      %v812 = vpow.pop %v811
      %v813 = vmul.f32 %v786, 1.442695
      %v814 = vpow.pop %v813
      %v815 = vmul.f32 %v787, 1.442695
      %v816 = vpow.pop %v815
      %v817 = vmul.f32 %v788, 1.442695
      %v818 = vpow.pop %v817
      %v819 = vmul.f32 %v789, 1.442695
      %v820 = vpow.pop %v819
      %v821 = vmul.f32 %v790, 1.442695
      %v822 = vpow.pop %v821
      %v823 = vadd.f32 %v792, 1.0
      %v824 = vadd.f32 %v794, 1.0
      %v825 = vadd.f32 %v796, 1.0
      %v826 = vadd.f32 %v798, 1.0
      %v827 = vadd.f32 %v800, 1.0
      %v828 = vadd.f32 %v802, 1.0
      %v829 = vadd.f32 %v804, 1.0
      %v830 = vadd.f32 %v806, 1.0
      %v831 = vadd.f32 %v808, 1.0
      %v832 = vadd.f32 %v810, 1.0
      %v833 = vadd.f32 %v812, 1.0
      %v834 = vadd.f32 %v814, 1.0
      %v835 = vadd.f32 %v816, 1.0
      %v836 = vadd.f32 %v818, 1.0
      %v837 = vadd.f32 %v820, 1.0
      %v838 = vadd.f32 %v822, 1.0
      %v839 = vrcp.pop %v823
      %v840 = vrcp.pop %v824
      %v841 = vrcp.pop %v825
      %v842 = vrcp.pop %v826
      %v843 = vrcp.pop %v827
      %v844 = vrcp.pop %v828
      %v845 = vrcp.pop %v829
      %v846 = vrcp.pop %v830
      %v847 = vrcp.pop %v831
      %v848 = vrcp.pop %v832
      %v849 = vrcp.pop %v833
      %v850 = vrcp.pop %v834
      %v851 = vrcp.pop %v835
      %v852 = vrcp.pop %v836
      %v853 = vrcp.pop %v837
      %v854 = vrcp.pop %v838
      %vm855 = vcmask 7168
      %856 = vst.msk [vmem:[%s281] sm:$0xff] %vm855, %v839
      %857 = vst.msk [vmem:[%s281 + $0x8] sm:$0xff] %vm855, %v840
      %858 = vst.msk [vmem:[%s281 + $0x10] sm:$0xff] %vm855, %v841
      %859 = vst.msk [vmem:[%s281 + $0x18] sm:$0xff] %vm855, %v842
      %860 = vst.msk [vmem:[%s281 + $0x20] sm:$0xff] %vm855, %v843
      %861 = vst.msk [vmem:[%s281 + $0x28] sm:$0xff] %vm855, %v844
      %862 = vst.msk [vmem:[%s281 + $0x30] sm:$0xff] %vm855, %v845
      %863 = vst.msk [vmem:[%s281 + $0x38] sm:$0xff] %vm855, %v846
      %864 = vst.msk [vmem:[%s281 + $0x40] sm:$0xff] %vm855, %v847
      %865 = vst.msk [vmem:[%s281 + $0x48] sm:$0xff] %vm855, %v848
      %866 = vst.msk [vmem:[%s281 + $0x50] sm:$0xff] %vm855, %v849
      %867 = vst.msk [vmem:[%s281 + $0x58] sm:$0xff] %vm855, %v850
      %868 = vst.msk [vmem:[%s281 + $0x60] sm:$0xff] %vm855, %v851
      %869 = vst.msk [vmem:[%s281 + $0x68] sm:$0xff] %vm855, %v852
      %870 = vst.msk [vmem:[%s281 + $0x70] sm:$0xff] %vm855, %v853
      %871 = vst.msk [vmem:[%s281 + $0x78] sm:$0xff] %vm855, %v854
      %s872 = smul.u32 16, %s19
      %p873 = scmp.lt.s32.totalorder %s872, 31
      %s874 = scalar_select %p873, %s872, 31
      %s875 = smul.addr %s874, 8
      %s876 = scalar_lea.vmem %s7, %s875
      // Predicated region
      $region49: #{lr_classification_forward.1} parent=47 // pred_check
        %p877 = pneg %p189
      $region50: #{lr_classification_forward.1} parent=47 // pred_check_branch
        %879 = sbr.rel (%p877) target = $region52
      $region51: #{lr_classification_forward.1} parent=47 // pred_region
        %s880 = smul.u32 16, %s19
      $region52: #{lr_classification_forward.1} parent=47 // pred_fallthru
        _
    $region48: #{lr_classification_forward.1} parent=5 // pred_fallthru
      _
    %p881 = scmp.le.s32.totalorder 2, %s14
    // Predicated region
    $region53: #{lr_classification_forward.1} parent=5 // pred_check
      %p882 = pneg %p881
    $region54: #{lr_classification_forward.1} parent=5 // pred_check_branch
      %884 = sbr.rel (%p882) target = $region56
    $region55: #{lr_classification_forward.1} parent=5 // pred_region
      %s885 = ssub.s32 %s14, 2
      // Predicated region
      $region57: #{lr_classification_forward.1} parent=55 // pred_check
        %p886 = pneg %p195
      $region58: #{lr_classification_forward.1} parent=55 // pred_check_branch
        %888 = sbr.rel (%p886) target = $region60
      $region59: #{lr_classification_forward.1} parent=55 // pred_region
        %s889 = smul.u32 16, %s20
        %p890 = scmp.lt.s32.totalorder %s889, 31
        %s891 = scalar_select %p890, %s889, 31
        %s892 = smul.addr %s891, 8
        %s893 = scalar_lea.vmem %s7, %s892
      $region60: #{lr_classification_forward.1} parent=55 // pred_fallthru
        _
    $region56: #{lr_classification_forward.1} parent=5 // pred_fallthru
      _
  $region6: #{lr_classification_forward.1} parent=0 // loop_footer
    %s18 = sadd.s32 1, %s14
  $region7: #{lr_classification_forward.1} parent=0 // loop_footer_branch
    %13 = sbr.rel target = $region3
  $region8: #{lr_classification_forward.1} parent=0 // loop_exit
    _

</llo_original>
